<compile_context>
chip_gen: v5e
topology: v5e:2x2
jax: 0.10.0
libtpu: 0.0.40
codegen_flags: <defaults>
</compile_context>

<pallas_src>
import functools

import jax
import jax.numpy as jnp
from jax import lax
from jax.experimental import pallas as pl
from jax.experimental.pallas import tpu as pltpu


def _round_up(x, m):
    return ((x + m - 1) // m) * m


def _amino_acid_embed_kernel(tok_ref, w_ref, pos_ref, out_ref, *,
                             n_res_type, n_atom_type, n_atom_pos,
                             n_channel, res_embed_size, atom_pad_id, eps):
    f32 = jnp.float32
    TN = tok_ref.shape[0]
    V_pad = w_ref.shape[0]
    E_out = out_ref.shape[1]
    C = n_channel

    tok = tok_ref[...]                                   # [TN, 2 + 2C] int32
    s = tok[:, 0:1]                                      # residue types
    rp = tok[:, 1:2].astype(f32)                         # residue positions

    # vocab-column frame for the fused block-diagonal table (lane-dense, V_pad % 128 == 0)
    col = lax.broadcasted_iota(jnp.int32, (TN, V_pad), 1)

    a_base = n_res_type
    ap_base = n_res_type + n_atom_type
    dead_col = n_res_type + n_atom_type + n_atom_pos     # all-zero row of W_block

    # Integer multi-hot counts (exact).  Padded atom channels are redirected to
    # the dead zero column on the NARROW [TN,1] index operand, which removes the
    # per-channel full-width mask multiply; counts accumulate in int32 and are
    # converted to f32 once, right before the matmul.
    cnt = (s == col).astype(jnp.int32)                   # residue one-hot
    denom_i = jnp.zeros((TN, 1), jnp.int32)
    for c in range(C):                                   # static unroll over channels
        a_c = tok[:, 2 + c: 3 + c]                       # [TN, 1]
        ap_c = tok[:, 2 + C + c: 3 + C + c]              # [TN, 1]
        pad = ap_c == atom_pad_id                        # [TN, 1]
        a_idx = jnp.where(pad, dead_col, a_c + a_base)   # narrow ops only
        ap_idx = jnp.where(pad, dead_col, ap_c + ap_base)
        cnt = cnt + (a_idx == col).astype(jnp.int32) + (ap_idx == col).astype(jnp.int32)
        denom_i = denom_i + (1 - pad.astype(jnp.int32))

    # Single fused lookup on the MXU (K = V_pad, native 128-wide contraction):
    #   cols [0, E_res)      -> residue token embedding
    #   cols [E_res, E_out)  -> pad-masked SUM of atom + atom-pos embeddings
    emb = jnp.dot(cnt.astype(f32), w_ref[...], preferred_element_type=f32)   # [TN, E_out]

    # Masked-mean divide applied post-matmul, only on the atom columns.
    # approx=False keeps the result within ~1 ulp of the reference divide.
    inv = pl.reciprocal(denom_i.astype(f32) + eps, approx=False)             # [TN, 1]
    col_e = lax.broadcasted_iota(jnp.int32, (TN, E_out), 1)
    emb = jnp.where(col_e < res_embed_size, emb, emb * inv)

    # Sinusoidal residue-position embedding with a single sin:
    #   even residue cols: sin(rp*w);  odd: sin(rp*w + pi/2) == cos(rp*w);
    #   atom cols: freq = phase = 0  ->  sin(0) = 0.
    freq = pos_ref[0:1, :]                               # [1, E_out]
    phase = pos_ref[1:2, :]                              # [1, E_out]
    pos_emb = jnp.sin(rp * freq + phase)                 # [TN, E_out]

    out_ref[...] = (emb + pos_emb).astype(out_ref.dtype)


def make_amino_acid_embedding(W_res, W_atom, W_atom_pos, *, atom_pad_id,
                              eps=1e-10, block_rows=1024, out_dtype=jnp.float32):
    """Build fused tables once; return a jitted forward(S, RP, A, AP).

    out_dtype can be set to jnp.bfloat16 if the consumer accepts it (halves the
    HBM writeback); float32 default preserves the reference semantics exactly.
    """
    V_res, E_res = W_res.shape
    V_a, E_atom = W_atom.shape
    V_ap = W_atom_pos.shape[0]
    V_total = V_res + V_a + V_ap
    # +1 guarantees a dead zero column; round K up to 128 (MXU-native, lane-dense)
    V_pad = _round_up(V_total + 1, 128)
    E_out = E_res + E_atom

    # fused block-diagonal embedding table  [V_pad, E_out]  (built ONCE)
    w = jnp.zeros((V_pad, E_out), jnp.float32)
    w = w.at[:V_res, :E_res].set(W_res.astype(jnp.float32))
    w = w.at[V_res:V_res + V_a, E_res:].set(W_atom.astype(jnp.float32))
    w = w.at[V_res + V_a:V_total, E_res:].set(W_atom_pos.astype(jnp.float32))

    # precomputed sinusoidal frequency / phase rows (zero on atom columns)
    half = jnp.power(10000.0,
                     -2.0 * jnp.arange(E_res // 2, dtype=jnp.float32) / E_res)
    freq = jnp.zeros((E_out,), jnp.float32).at[:E_res].set(jnp.repeat(half, 2))
    phase = jnp.zeros((E_out,), jnp.float32).at[1:E_res:2].set(jnp.pi / 2)
    pos_params = jnp.stack([freq, phase], axis=0)        # [2, E_out]

    @jax.jit
    def forward(S, RP, A, AP):
        N = S.shape[0]
        C = A.shape[1]
        # pack all per-residue integers into one tensor -> one input DMA per tile
        tok = jnp.concatenate(
            [S.reshape(N, 1), RP.reshape(N, 1), A, AP], axis=1).astype(jnp.int32)

        if N <= block_rows:
            TN = N
        else:
            # keep >= ~8 grid steps (pipelining + v7x 2-TC sharding), TN % 8 == 0
            TN = min(block_rows, max(8, _round_up(pl.cdiv(N, 8), 8)))
        grid = (pl.cdiv(N, TN),)

        kernel = functools.partial(
            _amino_acid_embed_kernel,
            n_res_type=V_res, n_atom_type=V_a, n_atom_pos=V_ap,
            n_channel=C, res_embed_size=E_res,
            atom_pad_id=atom_pad_id, eps=eps)

        # scoped-VMEM estimate (tok/out tiles lane-pad to 128 in VMEM, double-buffered);
        # only raise the limit when the default (16 MiB on v5e) would be exceeded.
        tile_bytes = TN * 128 * 4
        est = 4 * tile_bytes + 2 * V_pad * _round_up(E_out, 128) * 4 + 4 * 128 * 4
        cp = dict(dimension_semantics=("parallel",))
        if est > 12 * 1024 * 1024:
            cp["vmem_limit_bytes"] = min(2 * est, 100 * 1024 * 1024)

        return pl.pallas_call(
            kernel,
            out_shape=jax.ShapeDtypeStruct((N, E_out), out_dtype),
            grid=grid,
            in_specs=[pl.BlockSpec((TN, 2 + 2 * C), lambda i: (i, 0)),
                      pl.BlockSpec((V_pad, E_out), lambda i: (0, 0)),
                      pl.BlockSpec((2, E_out), lambda i: (0, 0))],
            # output written at its true width: no padded buffer + external slice
            out_specs=pl.BlockSpec((TN, E_out), lambda i: (i, 0)),
            compiler_params=pltpu.CompilerParams(**cp),
        )(tok, w, pos_params)

    return forward


def _reference(S, RP, A, AP, W_res, W_atom, W_atom_pos, atom_pad_id, eps=1e-10):
    """Pure-JAX re-implementation of the PyTorch forward for validation."""
    D = W_res.shape[1]
    res_tok = W_res[S]
    idx = jnp.arange(D // 2, dtype=jnp.float32)
    freq = jnp.power(10000.0, -2.0 * idx / D)
    ang = RP.astype(jnp.float32)[:, None] * freq[None, :]
    pos = jnp.stack([jnp.sin(ang), jnp.cos(ang)], axis=-1).reshape(-1, D)
    res_embed = res_tok + pos
    atom_embed = W_atom[A] + W_atom_pos[AP]
    mask = (AP != atom_pad_id)
    denom = mask.sum(-1, keepdims=True).astype(jnp.float32) + eps
    atom_out = (atom_embed * mask[..., None]).sum(1) / denom
    return jnp.concatenate([res_embed, atom_out], axis=-1)


if __name__ == "__main__":
    key = jax.random.PRNGKey(0)
    num_res_type, num_atom_type, num_atom_pos = 21, 16, 8
    E_res, E_atom = 32, 32
    atom_pad_id = 0
    C = 4                                   # atom channels

    k1, k2, k3, k4, k5, k6, k7 = jax.random.split(key, 7)
    # deterministic synthetic embedding tables (module __init__ shapes)
    W_res = jax.random.normal(k5, (num_res_type, E_res), jnp.float32) * 0.02
    W_atom = jax.random.normal(k6, (num_atom_type, E_atom), jnp.float32) * 0.02
    W_atom_pos = jax.random.normal(k7, (num_atom_pos, E_atom), jnp.float32) * 0.02

    def run_case(N, block_rows):
        fwd = make_amino_acid_embedding(W_res, W_atom, W_atom_pos,
                                        atom_pad_id=atom_pad_id,
                                        block_rows=block_rows)
        S = jax.random.randint(k1, (N,), 0, num_res_type, dtype=jnp.int32)
        RP = jax.random.randint(k2, (N,), 0, 192, dtype=jnp.int32)
        A = jax.random.randint(k3, (N, C), 0, num_atom_type, dtype=jnp.int32)
        AP = jax.random.randint(k4, (N, C), 0, num_atom_pos, dtype=jnp.int32)

        out = jax.block_until_ready(fwd(S, RP, A, AP))
        ref = _reference(S, RP, A, AP, W_res, W_atom, W_atom_pos, atom_pad_id)
        assert out.shape == (N, E_res + E_atom), out.shape
        # atol 2e-5: sin(x + pi/2) == cos(x) differs from an explicit cos by at
        # most ~half an ulp of the shifted argument; everything else is ~1 ulp.
        err = float(jnp.max(jnp.abs(out - ref)))
        assert jnp.allclose(out, ref, atol=2e-5, rtol=1e-5), err

    run_case(N=8, block_rows=1024)          # single-tile fast path
    run_case(N=13, block_rows=8)            # multi-tile grid with a ragged last block

    # NOTE: out-of-vocab indices land in a neighboring block's columns / the zero
    # pad region instead of raising like a gather would (valid inputs assumed).
    print("KERNEL_OK")
</pallas_src>

<mosaic_0001>
module attributes {stable_mosaic.version = 11 : i64} {
  func.func @_amino_acid_embed_kernel(%arg0: i32, %arg1: memref<8x10xi32, #tpu.memory_space<vmem>>, %arg2: memref<128x64xf32, #tpu.memory_space<vmem>>, %arg3: memref<2x64xf32, #tpu.memory_space<vmem>>, %arg4: memref<8x64xf32, #tpu.memory_space<vmem>>) attributes {dimension_semantics = [#tpu.dimension_semantics<parallel>], iteration_bounds = array<i64: 1>, scalar_prefetch = 0 : i64, scratch_operands = 0 : i64, tpu.core_type = #tpu.core_type<tc>, window_params = [{transform_indices = @transform_0, window_bounds = array<i64: 8, 10>}, {pipeline_mode = #tpu.pipeline_mode<synchronous>, transform_indices = @transform_1, window_bounds = array<i64: 128, 64>}, {pipeline_mode = #tpu.pipeline_mode<synchronous>, transform_indices = @transform_2, window_bounds = array<i64: 2, 64>}, {transform_indices = @transform_3, window_bounds = array<i64: 8, 64>}]} {
    %c0 = arith.constant 0 : index
    %c0_0 = arith.constant 0 : index
    %0 = vector.load %arg1[%c0, %c0_0] : memref<8x10xi32, #tpu.memory_space<vmem>>, vector<8x10xi32>
    %1 = vector.extract_strided_slice %0 {offsets = [0, 0], sizes = [8, 1], strides = [1, 1]} : vector<8x10xi32> to vector<8x1xi32>
    %2 = vector.extract_strided_slice %0 {offsets = [0, 1], sizes = [8, 1], strides = [1, 1]} : vector<8x10xi32> to vector<8x1xi32>
    %3 = arith.sitofp %2 : vector<8x1xi32> to vector<8x1xf32>
    %4 = tpu.iota {dimensions = array<i32: 1>} : vector<8x128xi32>
    %5 = vector.broadcast %1 : vector<8x1xi32> to vector<8x128xi32>
    %6 = arith.cmpi eq, %5, %4 : vector<8x128xi32>
    %7 = arith.extui %6 : vector<8x128xi1> to vector<8x128xi32>
    %c0_i32 = arith.constant 0 : i32
    %8 = vector.broadcast %c0_i32 : i32 to vector<8x1xi32>
    %9 = vector.extract_strided_slice %0 {offsets = [0, 2], sizes = [8, 1], strides = [1, 1]} : vector<8x10xi32> to vector<8x1xi32>
    %10 = vector.extract_strided_slice %0 {offsets = [0, 6], sizes = [8, 1], strides = [1, 1]} : vector<8x10xi32> to vector<8x1xi32>
    %c0_i32_1 = arith.constant 0 : i32
    %11 = vector.broadcast %c0_i32_1 : i32 to vector<8x1xi32>
    %12 = arith.cmpi eq, %10, %11 : vector<8x1xi32>
    %c21_i32 = arith.constant 21 : i32
    %13 = vector.broadcast %c21_i32 : i32 to vector<8x1xi32>
    %14 = arith.addi %9, %13 : vector<8x1xi32>
    %c45_i32 = arith.constant 45 : i32
    %15 = vector.broadcast %c45_i32 : i32 to vector<8x1xi32>
    %16 = arith.select %12, %15, %14 : vector<8x1xi1>, vector<8x1xi32>
    %c37_i32 = arith.constant 37 : i32
    %17 = vector.broadcast %c37_i32 : i32 to vector<8x1xi32>
    %18 = arith.addi %10, %17 : vector<8x1xi32>
    %c45_i32_2 = arith.constant 45 : i32
    %19 = vector.broadcast %c45_i32_2 : i32 to vector<8x1xi32>
    %20 = arith.select %12, %19, %18 : vector<8x1xi1>, vector<8x1xi32>
    %21 = vector.broadcast %16 : vector<8x1xi32> to vector<8x128xi32>
    %22 = arith.cmpi eq, %21, %4 : vector<8x128xi32>
    %23 = arith.extui %22 : vector<8x128xi1> to vector<8x128xi32>
    %24 = arith.addi %7, %23 : vector<8x128xi32>
    %25 = vector.broadcast %20 : vector<8x1xi32> to vector<8x128xi32>
    %26 = arith.cmpi eq, %25, %4 : vector<8x128xi32>
    %27 = arith.extui %26 : vector<8x128xi1> to vector<8x128xi32>
    %28 = arith.addi %24, %27 : vector<8x128xi32>
    %29 = arith.extui %12 : vector<8x1xi1> to vector<8x1xi32>
    %c1_i32 = arith.constant 1 : i32
    %30 = vector.broadcast %c1_i32 : i32 to vector<8x1xi32>
    %31 = arith.subi %30, %29 : vector<8x1xi32>
    %32 = arith.addi %8, %31 : vector<8x1xi32>
    %33 = vector.extract_strided_slice %0 {offsets = [0, 3], sizes = [8, 1], strides = [1, 1]} : vector<8x10xi32> to vector<8x1xi32>
    %34 = vector.extract_strided_slice %0 {offsets = [0, 7], sizes = [8, 1], strides = [1, 1]} : vector<8x10xi32> to vector<8x1xi32>
    %c0_i32_3 = arith.constant 0 : i32
    %35 = vector.broadcast %c0_i32_3 : i32 to vector<8x1xi32>
    %36 = arith.cmpi eq, %34, %35 : vector<8x1xi32>
    %c21_i32_4 = arith.constant 21 : i32
    %37 = vector.broadcast %c21_i32_4 : i32 to vector<8x1xi32>
    %38 = arith.addi %33, %37 : vector<8x1xi32>
    %c45_i32_5 = arith.constant 45 : i32
    %39 = vector.broadcast %c45_i32_5 : i32 to vector<8x1xi32>
    %40 = arith.select %36, %39, %38 : vector<8x1xi1>, vector<8x1xi32>
    %c37_i32_6 = arith.constant 37 : i32
    %41 = vector.broadcast %c37_i32_6 : i32 to vector<8x1xi32>
    %42 = arith.addi %34, %41 : vector<8x1xi32>
    %c45_i32_7 = arith.constant 45 : i32
    %43 = vector.broadcast %c45_i32_7 : i32 to vector<8x1xi32>
    %44 = arith.select %36, %43, %42 : vector<8x1xi1>, vector<8x1xi32>
    %45 = vector.broadcast %40 : vector<8x1xi32> to vector<8x128xi32>
    %46 = arith.cmpi eq, %45, %4 : vector<8x128xi32>
    %47 = arith.extui %46 : vector<8x128xi1> to vector<8x128xi32>
    %48 = arith.addi %28, %47 : vector<8x128xi32>
    %49 = vector.broadcast %44 : vector<8x1xi32> to vector<8x128xi32>
    %50 = arith.cmpi eq, %49, %4 : vector<8x128xi32>
    %51 = arith.extui %50 : vector<8x128xi1> to vector<8x128xi32>
    %52 = arith.addi %48, %51 : vector<8x128xi32>
    %53 = arith.extui %36 : vector<8x1xi1> to vector<8x1xi32>
    %c1_i32_8 = arith.constant 1 : i32
    %54 = vector.broadcast %c1_i32_8 : i32 to vector<8x1xi32>
    %55 = arith.subi %54, %53 : vector<8x1xi32>
    %56 = arith.addi %32, %55 : vector<8x1xi32>
    %57 = vector.extract_strided_slice %0 {offsets = [0, 4], sizes = [8, 1], strides = [1, 1]} : vector<8x10xi32> to vector<8x1xi32>
    %58 = vector.extract_strided_slice %0 {offsets = [0, 8], sizes = [8, 1], strides = [1, 1]} : vector<8x10xi32> to vector<8x1xi32>
    %c0_i32_9 = arith.constant 0 : i32
    %59 = vector.broadcast %c0_i32_9 : i32 to vector<8x1xi32>
    %60 = arith.cmpi eq, %58, %59 : vector<8x1xi32>
    %c21_i32_10 = arith.constant 21 : i32
    %61 = vector.broadcast %c21_i32_10 : i32 to vector<8x1xi32>
    %62 = arith.addi %57, %61 : vector<8x1xi32>
    %c45_i32_11 = arith.constant 45 : i32
    %63 = vector.broadcast %c45_i32_11 : i32 to vector<8x1xi32>
    %64 = arith.select %60, %63, %62 : vector<8x1xi1>, vector<8x1xi32>
    %c37_i32_12 = arith.constant 37 : i32
    %65 = vector.broadcast %c37_i32_12 : i32 to vector<8x1xi32>
    %66 = arith.addi %58, %65 : vector<8x1xi32>
    %c45_i32_13 = arith.constant 45 : i32
    %67 = vector.broadcast %c45_i32_13 : i32 to vector<8x1xi32>
    %68 = arith.select %60, %67, %66 : vector<8x1xi1>, vector<8x1xi32>
    %69 = vector.broadcast %64 : vector<8x1xi32> to vector<8x128xi32>
    %70 = arith.cmpi eq, %69, %4 : vector<8x128xi32>
    %71 = arith.extui %70 : vector<8x128xi1> to vector<8x128xi32>
    %72 = arith.addi %52, %71 : vector<8x128xi32>
    %73 = vector.broadcast %68 : vector<8x1xi32> to vector<8x128xi32>
    %74 = arith.cmpi eq, %73, %4 : vector<8x128xi32>
    %75 = arith.extui %74 : vector<8x128xi1> to vector<8x128xi32>
    %76 = arith.addi %72, %75 : vector<8x128xi32>
    %77 = arith.extui %60 : vector<8x1xi1> to vector<8x1xi32>
    %c1_i32_14 = arith.constant 1 : i32
    %78 = vector.broadcast %c1_i32_14 : i32 to vector<8x1xi32>
    %79 = arith.subi %78, %77 : vector<8x1xi32>
    %80 = arith.addi %56, %79 : vector<8x1xi32>
    %81 = vector.extract_strided_slice %0 {offsets = [0, 5], sizes = [8, 1], strides = [1, 1]} : vector<8x10xi32> to vector<8x1xi32>
    %82 = vector.extract_strided_slice %0 {offsets = [0, 9], sizes = [8, 1], strides = [1, 1]} : vector<8x10xi32> to vector<8x1xi32>
    %c0_i32_15 = arith.constant 0 : i32
    %83 = vector.broadcast %c0_i32_15 : i32 to vector<8x1xi32>
    %84 = arith.cmpi eq, %82, %83 : vector<8x1xi32>
    %c21_i32_16 = arith.constant 21 : i32
    %85 = vector.broadcast %c21_i32_16 : i32 to vector<8x1xi32>
    %86 = arith.addi %81, %85 : vector<8x1xi32>
    %c45_i32_17 = arith.constant 45 : i32
    %87 = vector.broadcast %c45_i32_17 : i32 to vector<8x1xi32>
    %88 = arith.select %84, %87, %86 : vector<8x1xi1>, vector<8x1xi32>
    %c37_i32_18 = arith.constant 37 : i32
    %89 = vector.broadcast %c37_i32_18 : i32 to vector<8x1xi32>
    %90 = arith.addi %82, %89 : vector<8x1xi32>
    %c45_i32_19 = arith.constant 45 : i32
    %91 = vector.broadcast %c45_i32_19 : i32 to vector<8x1xi32>
    %92 = arith.select %84, %91, %90 : vector<8x1xi1>, vector<8x1xi32>
    %93 = vector.broadcast %88 : vector<8x1xi32> to vector<8x128xi32>
    %94 = arith.cmpi eq, %93, %4 : vector<8x128xi32>
    %95 = arith.extui %94 : vector<8x128xi1> to vector<8x128xi32>
    %96 = arith.addi %76, %95 : vector<8x128xi32>
    %97 = vector.broadcast %92 : vector<8x1xi32> to vector<8x128xi32>
    %98 = arith.cmpi eq, %97, %4 : vector<8x128xi32>
    %99 = arith.extui %98 : vector<8x128xi1> to vector<8x128xi32>
    %100 = arith.addi %96, %99 : vector<8x128xi32>
    %101 = arith.extui %84 : vector<8x1xi1> to vector<8x1xi32>
    %c1_i32_20 = arith.constant 1 : i32
    %102 = vector.broadcast %c1_i32_20 : i32 to vector<8x1xi32>
    %103 = arith.subi %102, %101 : vector<8x1xi32>
    %104 = arith.addi %80, %103 : vector<8x1xi32>
    %105 = arith.sitofp %100 : vector<8x128xi32> to vector<8x128xf32>
    %c0_21 = arith.constant 0 : index
    %c0_22 = arith.constant 0 : index
    %106 = vector.load %arg2[%c0_21, %c0_22] : memref<128x64xf32, #tpu.memory_space<vmem>>, vector<128x64xf32>
    %cst = arith.constant dense<0.000000e+00> : vector<8x64xf32>
    %107 = tpu.matmul %105, %106, %cst {dimension_numbers = #tpu.dot_dimension_numbers<[1], [0], [0], [1], [0, 0, 1, 1], [], []>} : vector<8x128xf32>, vector<128x64xf32>, vector<8x64xf32> -> vector<8x64xf32>
    %108 = arith.sitofp %104 : vector<8x1xi32> to vector<8x1xf32>
    %cst_23 = arith.constant 1.000000e-10 : f32
    %109 = vector.broadcast %cst_23 : f32 to vector<8x1xf32>
    %110 = arith.addf %108, %109 : vector<8x1xf32>
    %111 = tpu.reciprocal %110 : vector<8x1xf32> -> vector<8x1xf32>
    %112 = tpu.iota {dimensions = array<i32: 1>} : vector<8x64xi32>
    %c32_i32 = arith.constant 32 : i32
    %113 = vector.broadcast %c32_i32 : i32 to vector<8x64xi32>
    %114 = arith.cmpi slt, %112, %113 : vector<8x64xi32>
    %115 = vector.broadcast %111 : vector<8x1xf32> to vector<8x64xf32>
    %116 = arith.mulf %107, %115 : vector<8x64xf32>
    %117 = arith.select %114, %107, %116 : vector<8x64xi1>, vector<8x64xf32>
    %c0_24 = arith.constant 0 : index
    %c0_25 = arith.constant 0 : index
    %118 = vector.load %arg3[%c0_24, %c0_25] : memref<2x64xf32, #tpu.memory_space<vmem>>, vector<1x64xf32>
    %c1 = arith.constant 1 : index
    %c0_26 = arith.constant 0 : index
    %119 = vector.load %arg3[%c1, %c0_26] : memref<2x64xf32, #tpu.memory_space<vmem>>, vector<1x64xf32>
    %120 = vector.broadcast %3 : vector<8x1xf32> to vector<8x64xf32>
    %121 = vector.broadcast %118 : vector<1x64xf32> to vector<8x64xf32>
    %122 = arith.mulf %120, %121 : vector<8x64xf32>
    %123 = vector.broadcast %119 : vector<1x64xf32> to vector<8x64xf32>
    %124 = arith.addf %122, %123 : vector<8x64xf32>
    %125 = math.sin %124 : vector<8x64xf32>
    %126 = arith.addf %117, %125 : vector<8x64xf32>
    %c0_27 = arith.constant 0 : index
    %c0_28 = arith.constant 0 : index
    %127 = vector.load %arg4[%c0_27, %c0_28] : memref<8x64xf32, #tpu.memory_space<vmem>>, vector<8x64xf32>
    tpu.vector_store %arg4[%c0_27, %c0_28], %126 {strides = array<i32>} : memref<8x64xf32, #tpu.memory_space<vmem>>, vector<8x64xf32>,
    return
  }
  func.func @transform_0(%arg0: i32) -> (i32, i32) {
    %c0_i32 = arith.constant 0 : i32
    %c0_i32_0 = arith.constant 0 : i32
    return %arg0, %c0_i32 : i32, i32
  }
  func.func @transform_1(%arg0: i32) -> (i32, i32) {
    %c0_i32 = arith.constant 0 : i32
    %c0_i32_0 = arith.constant 0 : i32
    %c0_i32_1 = arith.constant 0 : i32
    return %c0_i32, %c0_i32_0 : i32, i32
  }
  func.func @transform_2(%arg0: i32) -> (i32, i32) {
    %c0_i32 = arith.constant 0 : i32
    %c0_i32_0 = arith.constant 0 : i32
    %c0_i32_1 = arith.constant 0 : i32
    return %c0_i32, %c0_i32_0 : i32, i32
  }
  func.func @transform_3(%arg0: i32) -> (i32, i32) {
    %c0_i32 = arith.constant 0 : i32
    %c0_i32_0 = arith.constant 0 : i32
    return %arg0, %c0_i32 : i32, i32
  }
}

</mosaic_0001>

<llo_original>
// kernel: forward.1
$region0: #{forward.1}
  #allocation0 [shape = 'u32[]', space=smem, size = 0x4, offset = 0x4, fixed_abs, tag = 'smem constant byte address 0x4 - core index']
  #allocation1 [shape = 'u32[72,128]{1,0:T(1,128)}', space=vmem, size = 0x9000, scoped, tag = 'internal scratch']
  %s0 = inlined_call_operand.vmem [shape: s32[8,10], index: 0, kind: input, shape index: {}]
  %s1 = inlined_call_operand.hbm [shape: f32[128,64], index: 1, kind: input, shape index: {}]
  %s2 = inlined_call_operand.vmem [shape: f32[2,64], index: 2, kind: input, shape index: {}]
  %s3 = inlined_call_operand.hbm [shape: f32[8,64], index: 3, kind: output, shape index: {}]
  %s4 = sld [smem:[#allocation0]]
  $region26: #{forward.1} parent=0
    _
  %s6 = ssub.s32 1, %s4
  %s7 = scalar_select 0, %s6, %s4
  $region1: #{forward.1} parent=0
    #allocation2 [shape = 'u8[65536]{0}', space=vmem, size = 0x10000, scoped, tag = 'input window, operand 1, single buffered']
    #allocation3 [shape = 's32[1]{0}', space=sflag, size = 0x4, scoped, tag = 'scoped memory for forward.1']
    #allocation4 [shape = 's32[1]{0}', space=sflag, size = 0x4, scoped, tag = 'scoped memory for forward.1']
    #allocation5 [shape = 'u8[4096]{0}', space=vmem, size = 0x1000, scoped, tag = 'output window, operand 0, single buffered']
    %8 = vsyncpa [#allocation3], 0
    %9 = vsyncpa [#allocation4], 0
    // Predicated region
    $region2: #{forward.1} parent=1 // pred_check
      _
    $region3: #{forward.1} parent=1 // pred_check_branch
      %11 = sbr.rel (0) target = $region5
    $region4: #{forward.1} parent=1 // pred_region
      _
    $region5: #{forward.1} parent=1 // pred_fallthru
      _
    // Predicated region
    $region6: #{forward.1} parent=1 // pred_check
      _
    $region7: #{forward.1} parent=1 // pred_check_branch
      %13 = sbr.rel (0) target = $region9
    $region8: #{forward.1} parent=1 // pred_region
      %15 = vsyncadd [#allocation3], 0
      %s16 = sshll.u32 %s1, 4
      %s17 = int_to_ptr.hbm [resolvable:$true] %s16
      %s18 = sshll.u32 [#allocation2], 4
      %s19 = int_to_ptr.vmem [resolvable:$true] %s18
      %24 = dma.hbm_to_vmem [thread:$0]  %s17, 2048, %s19, [#allocation3], 128, 128, 8
    $region9: #{forward.1} parent=1 // pred_fallthru
      _
    // Predicated region
    $region10: #{forward.1} parent=1 // pred_check
      _
    $region11: #{forward.1} parent=1 // pred_check_branch
      %26 = sbr.rel (0) target = $region13
    $region12: #{forward.1} parent=1 // pred_region
      _
    $region13: #{forward.1} parent=1 // pred_fallthru
      _
    // Predicated region
    $region14: #{forward.1} parent=1 // pred_check
      _
    $region15: #{forward.1} parent=1 // pred_check_branch
      %28 = sbr.rel (0) target = $region17
    $region16: #{forward.1} parent=1 // pred_region
      %30 = dma.done [#allocation3], 2048
    $region17: #{forward.1} parent=1 // pred_fallthru
      _
    %v31 = vld [vmem:[%s0] sm:$0xff]
    %v32 = vcvt.s32.f32 %v31
    %v33 = vlaneseq
    %v34 = vand.u32 %v33, 127
    %35 = vset.pattern.permute.xlu0 0
    %36 = vperm.xlu0 %35, %v31
    %v37 = vpop.permute.xlu0 %36
    %vm38 = vcmp.eq.s32.totalorder %v37, %v34
    %v39 = vsel %vm38, 1, 0
    %vm40 = vcmp.eq.s32.totalorder %v31, 0
    %v41 = vadd.s32 %v31, 21
    %42 = vrot.lane.b32.xlu0 %v41, 4
    %v43 = vpop.permute.xlu0 %42
    %v44 = vsel %vm40, 45, %v43
    %v45 = vadd.s32 %v31, 37
    %v46 = vsel %vm40, 45, %v45
    %47 = vset.pattern.permute.xlu0 6
    %48 = vperm.xlu0 %47, %v44
    %v49 = vpop.permute.xlu0 %48
    %vm50 = vcmp.eq.s32.totalorder %v49, %v34
    %v51 = vsel %vm50, 1, 0
    %v52 = vadd.s32 %v39, %v51
    %53 = vset.pattern.permute.xlu0 6
    %54 = vperm.xlu0 %53, %v46
    %v55 = vpop.permute.xlu0 %54
    %vm56 = vcmp.eq.s32.totalorder %v55, %v34
    %v57 = vsel %vm56, 1, 0
    %v58 = vadd.s32 %v52, %v57
    %v59 = vsel %vm40, 1, 0
    %v60 = vsub.s32 1, %v59
    %61 = vset.pattern.permute.xlu0 7
    %62 = vperm.xlu0 %61, %v44
    %v63 = vpop.permute.xlu0 %62
    %vm64 = vcmp.eq.s32.totalorder %v63, %v34
    %v65 = vsel %vm64, 1, 0
    %v66 = vadd.s32 %v58, %v65
    %67 = vset.pattern.permute.xlu0 7
    %68 = vperm.xlu0 %67, %v46
    %v69 = vpop.permute.xlu0 %68
    %vm70 = vcmp.eq.s32.totalorder %v69, %v34
    %v71 = vsel %vm70, 1, 0
    %v72 = vadd.s32 %v66, %v71
    %73 = vrot.lane.b32.xlu0 %v60, 127
    %v74 = vpop.permute.xlu0 %73
    %v75 = vadd.s32 %v60, %v74
    %76 = vset.pattern.permute.xlu0 8
    %77 = vperm.xlu0 %76, %v44
    %v78 = vpop.permute.xlu0 %77
    %vm79 = vcmp.eq.s32.totalorder %v78, %v34
    %v80 = vsel %vm79, 1, 0
    %v81 = vadd.s32 %v72, %v80
    %82 = vset.pattern.permute.xlu0 8
    %83 = vperm.xlu0 %82, %v46
    %v84 = vpop.permute.xlu0 %83
    %vm85 = vcmp.eq.s32.totalorder %v84, %v34
    %v86 = vsel %vm85, 1, 0
    %v87 = vadd.s32 %v81, %v86
    %88 = vrot.lane.b32.xlu0 %v60, 126
    %v89 = vpop.permute.xlu0 %88
    %v90 = vadd.s32 %v75, %v89
    %91 = vset.pattern.permute.xlu0 9
    %92 = vperm.xlu0 %91, %v44
    %v93 = vpop.permute.xlu0 %92
    %vm94 = vcmp.eq.s32.totalorder %v93, %v34
    %v95 = vsel %vm94, 1, 0
    %v96 = vadd.s32 %v87, %v95
    %97 = vset.pattern.permute.xlu0 9
    %98 = vperm.xlu0 %97, %v46
    %v99 = vpop.permute.xlu0 %98
    %vm100 = vcmp.eq.s32.totalorder %v99, %v34
    %v101 = vsel %vm100, 1, 0
    %v102 = vadd.s32 %v96, %v101
    %103 = vrot.lane.b32.xlu0 %v60, 125
    %v104 = vpop.permute.xlu0 %103
    %v105 = vadd.s32 %v90, %v104
    %v106 = vcvt.s32.f32 %v102
    %v107 = vld [vmem:[#allocation2] sm:$0xff]
    %v108 = vld [vmem:[#allocation2 + $0x8] sm:$0xff]
    %v109 = vld [vmem:[#allocation2 + $0x10] sm:$0xff]
    %v110 = vld [vmem:[#allocation2 + $0x18] sm:$0xff]
    %v111 = vld [vmem:[#allocation2 + $0x20] sm:$0xff]
    %v112 = vld [vmem:[#allocation2 + $0x28] sm:$0xff]
    %v113 = vld [vmem:[#allocation2 + $0x30] sm:$0xff]
    %v114 = vld [vmem:[#allocation2 + $0x38] sm:$0xff]
    %v115 = vld [vmem:[#allocation2 + $0x40] sm:$0xff]
    %v116 = vld [vmem:[#allocation2 + $0x48] sm:$0xff]
    %v117 = vld [vmem:[#allocation2 + $0x50] sm:$0xff]
    %v118 = vld [vmem:[#allocation2 + $0x58] sm:$0xff]
    %v119 = vld [vmem:[#allocation2 + $0x60] sm:$0xff]
    %v120 = vld [vmem:[#allocation2 + $0x68] sm:$0xff]
    %v121 = vld [vmem:[#allocation2 + $0x70] sm:$0xff]
    %v122 = vld [vmem:[#allocation2 + $0x78] sm:$0xff]
    %123 = vmatpush.msra.mxu0 %v122
    %124 = vmatpush.msra.mxu0 %v121
    %125 = vmatpush.msra.mxu0 %v120
    %126 = vmatpush.msra.mxu0 %v119
    %127 = vmatpush.msra.mxu0 %v118
    %128 = vmatpush.msra.mxu0 %v117
    %129 = vmatpush.msra.mxu0 %v116
    %130 = vmatpush.msra.mxu0 %v115
    %131 = vmatpush.msra.mxu0 %v114
    %132 = vmatpush.msra.mxu0 %v113
    %133 = vmatpush.msra.mxu0 %v112
    %134 = vmatpush.msra.mxu0 %v111
    %135 = vmatpush.msra.mxu0 %v110
    %136 = vmatpush.msra.mxu0 %v109
    %137 = vmatpush.msra.mxu0 %v108
    %138 = vmatpush.msra.mxu0 %v107
    %139 = vmatmul.f32.gmra.mxu0 %v106
    %v140 = vpop.f32.mrf.mxu0
    %v141 = vadd.f32 0.0, %v140
    %142 = vdwg.mxu0
    %v143 = vcvt.s32.f32 %v105
    %v144 = vadd.f32 %v143, 1e-10
    %v145 = vrcp.pop %v144
    %v146 = vmul.f32 %v144, %v145
    %v147 = vsub.f32 1.0, %v146
    %v148 = vmul.f32 %v145, %v147
    %v149 = vadd.f32 %v145, %v148
    %vm150 = vweird.f32 %v144
    %vm151 = vweird.f32 %v145
    %vm152 = vmor %vm150, %vm151
    %v153 = vsel %vm152, %v145, %v149
    %v154 = vand.u32 2147483647, %v144
    %vm155 = vcmp.eq.f32.partialorder %v154, 8.507059e+37
    %v156 = vand.u32 %v144, 2147483648
    %v157 = vor.u32 1.1754944e-38, %v156
    %v158 = vsel %vm155, %v157, %v153
    %vm159 = vcmp.lt.s32.totalorder %v34, 32
    %161 = vset.pattern.permute.xlu0 6
    %162 = vperm.xlu0 %161, %v158
    %v163 = vpop.permute.xlu0 %162
    %v165 = vmul.f32 %v141, %v163
    %v166 = vsel %vm159, %v141, %v165
    %v167 = vld [vmem:[%s2] sm:$0x1]
    %v168 = vld [vmem:[%s2 + $0x1] sm:$0x1]
    %170 = vset.pattern.permute.xlu0 1
    %171 = vperm.xlu0 %170, %v32
    %v172 = vpop.permute.xlu0 %171
    %v174 = vperm.slane %v167, 0
    %v175 = vmul.f32 %v172, %v174
    %v176 = vperm.slane %v168, 0
    %v177 = vadd.f32 %v175, %v176
    %v178 = vand.u32 2147483647, %v177
    %vm179 = vcmp.le.f32.partialorder %v178, 0.7853982
    %vm180 = vcmp.lt.s32.totalorder %v177, 0
    %v181 = vand.u32 %v177, 2139095040
    %v182 = vshrl.u32 %v181, 23
    %v183 = vsub.s32 %v182, 127
    %v184 = vand.u32 2147483647, %v177
    %v185 = vand.u32 %v184, 8388607
    %v186 = vor.u32 %v185, 8388608
    %v187 = vsub.s32 0, %v186
    %v188 = vadd.s32 %v183, 1
    %vm189 = vcmp.gt.s32.totalorder %v188, 0
    %v190 = vsel %vm189, %v188, 0
    %v191 = vshrl.u32 %v190, 5
    %v192 = vand.u32 %v190, 31
    %v193 = vsub.s32 32, %v192
    %v194 = vshrl.u32 683565275, %v193
    %v195 = vshll.u32 683565275, %v192
    %v196 = vshrl.u32 2475754826, %v193
    %v197 = vor.u32 %v195, %v196
    %v198 = vshll.u32 2475754826, %v192
    %v199 = vshrl.u32 2131351028, %v193
    %v200 = vor.u32 %v198, %v199
    %v201 = vshll.u32 2131351028, %v192
    %v202 = vshrl.u32 2102212464, %v193
    %v203 = vor.u32 %v201, %v202
    %v204 = vshll.u32 2102212464, %v192
    %v205 = vshrl.u32 920167782, %v193
    %v206 = vor.u32 %v204, %v205
    %v207 = vshll.u32 920167782, %v192
    %v208 = vshrl.u32 1326507024, %v193
    %v209 = vor.u32 %v207, %v208
    %vm210 = vcmp.lt.s32.totalorder %v191, 1
    %vm211 = vcmp.lt.s32.totalorder %v191, 2
    %vm212 = vcmp.lt.s32.totalorder %v191, 3
    %vm213 = vcmp.lt.s32.totalorder %v191, 4
    %v214 = vsel %vm210, %v194, %v197
    %v215 = vsel %vm213, %v203, 2102212464
    %v216 = vsel %vm212, %v200, %v215
    %v217 = vsel %vm211, %v214, %v216
    %v218 = vsel %vm210, %v197, %v200
    %v219 = vsel %vm213, %v206, 920167782
    %v220 = vsel %vm212, %v203, %v219
    %v221 = vsel %vm211, %v218, %v220
    %v222 = vsel %vm210, %v200, %v203
    %v223 = vsel %vm213, %v209, 1326507024
    %v224 = vsel %vm212, %v206, %v223
    %v225 = vsel %vm211, %v222, %v224
    %v226 = vshll.u32 %v186, 8
    %v227 = vand.u32 %v226, 65535
    %v228 = vshrl.u32 %v226, 16
    %v229 = vand.u32 %v225, 65535
    %v230 = vshrl.u32 %v225, 16
    %v231 = vmul.u32 %v227, %v229
    %v232 = vmul.u32 %v227, %v230
    %v233 = vmul.u32 %v228, %v229
    %v234 = vmul.u32 %v228, %v230
    %v235 = vshll.u32 %v232, 16
    %v236 = vshrl.u32 %v232, 16
    %v237 = vshll.u32 %v233, 16
    %v238 = vshrl.u32 %v233, 16
    %vm239 = vc.u32 %v231, %v235
    %v240 = vsel %vm239, 1, 0
    %v241 = vadd.s32 %v231, %v235
    %v242 = vadd.s32 %v234, %v240
    %vm243 = vc.u32 %v241, %v237
    %v244 = vsel %vm243, 1, 0
    %v245 = vadd.s32 %v241, %v237
    %v246 = vadd.s32 %v242, %v244
    %v247 = vadd.s32 %v246, %v236
    %v248 = vadd.s32 %v247, %v238
    %v249 = vand.u32 %v226, 65535
    %v250 = vshrl.u32 %v226, 16
    %v251 = vand.u32 %v221, 65535
    %v252 = vshrl.u32 %v221, 16
    %v253 = vmul.u32 %v249, %v251
    %v254 = vmul.u32 %v249, %v252
    %v255 = vmul.u32 %v250, %v251
    %v256 = vmul.u32 %v250, %v252
    %v257 = vshll.u32 %v254, 16
    %v258 = vshrl.u32 %v254, 16
    %v259 = vshll.u32 %v255, 16
    %v260 = vshrl.u32 %v255, 16
    %vm261 = vc.u32 %v253, %v257
    %v262 = vsel %vm261, 1, 0
    %v263 = vadd.s32 %v253, %v257
    %v264 = vadd.s32 %v256, %v262
    %vm265 = vc.u32 %v263, %v259
    %v266 = vsel %vm265, 1, 0
    %v267 = vadd.s32 %v263, %v259
    %v268 = vadd.s32 %v264, %v266
    %v269 = vadd.s32 %v268, %v258
    %v270 = vadd.s32 %v269, %v260
    %v271 = vmul.u32 %v226, %v217
    %v272 = vadd.s32 %v248, %v267
    %vm273 = vc.u32 %v248, %v267
    %v274 = vadd.s32 %v270, 1
    %v275 = vsel %vm273, %v274, %v270
    %v276 = vadd.s32 %v271, %v275
    %v277 = vadd.s32 %v276, 536870912
    %v278 = vshrl.u32 %v277, 30
    %v279 = vshll.u32 %v278, 30
    %v280 = vsub.s32 %v276, %v279
    %vm281 = vcmp.lt.s32.totalorder %v280, 0
    %v282 = vsub.s32 0, %v280
    %v283 = vsel %vm281, %v282, %v280
    %v284 = vclz %v283
    %v285 = vsub.s32 %v284, 2
    %vm286 = vcmp.gt.s32.totalorder 0, %v285
    %v287 = vsel %vm286, 0, %v285
    %v288 = vsub.s32 32, %v287
    %v289 = vshll.u32 %v280, %v287
    %v290 = vshrl.u32 %v272, %v288
    %v291 = vor.u32 %v289, %v290
    %v292 = vsub.s32 4294967266, %v287
    %v293 = vadd.s32 %v292, 127
    %v294 = vshll.u32 %v293, 23
    %v295 = vor.u32 4788187, %v294
    %v296 = vand.u32 2147483647, %v295
    %v298 = vcvt.s32.f32 %v291
    %v299 = vmul.f32 %v298, %v296
    %v300 = vxor.u32 %v299, 2147483648
    %v301 = vsel %vm180, %v300, %v299
    %v302 = vsub.s32 4, %v278
    %v303 = vsel %vm180, %v302, %v278
    %v304 = vsel %vm179, %v177, %v301
    %v305 = vsel %vm179, 0, %v303
    %v306 = vmul.f32 %v304, %v304
    %v307 = vmul.f32 %v306, -0.001358992
    %v308 = vadd.f32 %v307, 0.041655596
    %v309 = vmul.f32 %v306, %v308
    %v310 = vadd.f32 %v309, -0.4999988
    %v311 = vmul.f32 %v306, %v310
    %v312 = vadd.f32 1.0, %v311
    %v313 = vmul.f32 %v304, %v304
    %v314 = vmul.f32 %v313, -0.00019511016
    %v315 = vadd.f32 %v314, 0.008332121
    %v316 = vmul.f32 %v313, %v315
    %v317 = vadd.f32 %v316, -0.16666654
    %v318 = vmul.f32 %v313, %v317
    %v319 = vadd.f32 %v318, 1.0
    %v320 = vmul.f32 %v319, %v304
    %vm321 = vweird.f32 %v177
    %v322 = vadd.s32 %v305, 3
    %v323 = vand.u32 %v322, 3
    %vm324 = vcmp.lt.s32.totalorder %v323, 2
    %vm325 = vcmp.eq.s32.totalorder %v323, 0
    %v326 = vxor.u32 %v320, 2147483648
    %v327 = vsel %vm325, %v312, %v326
    %vm328 = vcmp.eq.s32.totalorder %v323, 2
    %v329 = vxor.u32 %v312, 2147483648
    %v330 = vsel %vm328, %v329, %v320
    %v331 = vsel %vm324, %v327, %v330
    %v332 = vsel %vm321, nan, %v331
    %v333 = vadd.f32 %v166, %v332
    %vm334 = vcmask 523264
    %335 = vst.msk [vmem:[#allocation5] sm:$0xff] %vm334, %v333
    // Predicated region
    $region18: #{forward.1} parent=1 // pred_check
      _
    $region19: #{forward.1} parent=1 // pred_check_branch
      %337 = sbr.rel (0) target = $region21
    $region20: #{forward.1} parent=1 // pred_region
      %339 = vsyncadd [#allocation4], 0
      %s341 = sshll.u32 [#allocation5], 4
      %s342 = int_to_ptr.vmem [resolvable:$true] %s341
      %s343 = sshll.u32 %s3, 4
      %s344 = int_to_ptr.hbm [resolvable:$true] %s343
      %346 = dma.vmem_to_hbm [thread:$0]  %s342, 128, %s344, [#allocation4]
    $region21: #{forward.1} parent=1 // pred_fallthru
      _
    // Predicated region
    $region22: #{forward.1} parent=1 // pred_check
      _
    $region23: #{forward.1} parent=1 // pred_check_branch
      %348 = sbr.rel (0) target = $region25
    $region24: #{forward.1} parent=1 // pred_region
      %350 = dma.done [#allocation4], 128
    $region25: #{forward.1} parent=1 // pred_fallthru
      _
    %351 = vsyncpa [#allocation3], 1
    %352 = vsyncpa [#allocation4], 1

</llo_original>
